<compile_context>
chip_gen: v6e
topology: v6e:2x2x1
jax: 0.10.0
libtpu: 0.0.40
codegen_flags: <defaults>
</compile_context>

<pallas_src>
import functools

import jax
import jax.numpy as jnp
from jax.experimental import pallas as pl
from jax.experimental.pallas import tpu as pltpu


def _patch_embed_kernel(x_ref, w_ref, b_ref, o_ref, *, compute_dtype):
    """One block of packed patch-rows.

    x_ref: (rb, rpack*P*W)              pixels in HBM dtype; cast to compute dtype in VMEM
    w_ref: (rpack*P*W, rpack*nw*hidden) zero-padded block weight (resident)
    b_ref: (1, rpack*nw*hidden)         bias tiled rpack*nw times, f32 (resident)
    o_ref: (rb, rpack*nw*hidden)        lane-dense output
    """
    x = x_ref[...].astype(compute_dtype)
    acc = jnp.dot(x, w_ref[...], preferred_element_type=jnp.float32)
    o_ref[...] = (acc + b_ref[...]).astype(o_ref.dtype)


def _default_vmem_budget():
    budget = 12 << 20  # safely under every generation's default scoped-VMEM limit (v5e: 16 MiB)
    try:
        cap = getattr(pltpu.get_tpu_info(), "vmem_capacity_bytes", None)
        if cap:
            budget = int(min(budget, cap // 4))  # extra headroom on small-VMEM parts (v7x: 64 MiB)
    except Exception:
        pass
    return int(budget)


def patch_to_vec(x, weight, bias, patch_size, *,
                 out_dtype=jnp.bfloat16,       # bf16 writeback halves the dominant HBM traffic
                 compute_dtype=jnp.bfloat16,   # MXU input dtype; jnp.float32 for exact f32 conv
                 vmem_budget_bytes=None,
                 vmem_limit_bytes=None,
                 block_rows=None,              # override tile rows (testing / tuning)
                 target_grid_steps=8):
    """x: [B, 1, H, W]; weight: [hidden, 1, P, P]; bias: [hidden] -> [B, N, hidden]."""
    B, C, H, W = x.shape
    assert C == 1, "PatchToVec uses Conv2d(1, hidden, ...)"
    P = int(patch_size)
    hidden = weight.shape[0]
    assert H % P == 0 and W % P == 0
    nh, nw = H // P, W // P
    N = nh * nw
    R = B * nh                                   # total patch-rows

    # ---- pack rpack consecutive patch-rows per kernel row so input loads are lane-dense ----
    rpack = 1
    while rpack * P * W < 128 and R % (2 * rpack) == 0 and rpack < 8:
        rpack *= 2
    Rp = R // rpack
    in_w = rpack * P * W
    out_w = rpack * nw * hidden

    # ---- one-time parameter prep (block weight stays VMEM-resident) ----
    # W_block[(r, kh, c, kw), (r', c', h)] = weight[h, 0, kh, kw] * (c == c') * (r == r')
    w4 = weight.reshape(hidden, P, P).transpose(1, 2, 0)          # (kh, kw, hidden)
    eye_c = jnp.eye(nw, dtype=weight.dtype)
    eye_r = jnp.eye(rpack, dtype=weight.dtype)
    w_block = jnp.einsum('abh,cC,rR->racbRCh', w4, eye_c, eye_r
                         ).reshape(in_w, out_w).astype(compute_dtype)
    b_block = jnp.tile(bias.astype(jnp.float32), rpack * nw).reshape(1, out_w)

    compute_itemsize = jnp.dtype(compute_dtype).itemsize
    out_itemsize = jnp.dtype(out_dtype).itemsize
    w_block_bytes = in_w * out_w * compute_itemsize
    # TODO(synk): for production ViT widths (hidden >= 768) the zero-padded block weight no
    # longer fits VMEM and the op becomes MXU-bound; switch to per-patch-column dots with a
    # VMEM scratch gather (or a one-time wrapper im2col) instead of this single-matmul path.
    assert w_block_bytes <= (4 << 20), "block weight too large for the single-matmul path"

    x2 = x.reshape(Rp, in_w)                     # free, contiguous reshape of NCHW input

    # ---- tile selection: VMEM-budget aware, >= ~target_grid_steps steps, 16-aligned ----
    if vmem_budget_bytes is None:
        vmem_budget_bytes = _default_vmem_budget()
    per_row = (2 * in_w * x.dtype.itemsize       # double-buffered input block
               + 2 * out_w * out_itemsize        # double-buffered output block
               + in_w * compute_itemsize         # cast copy of x in VMEM
               + out_w * 4                       # f32 matmul accumulator (+ bias add)
               + out_w * compute_itemsize)       # cast before the store
    resident = 2 * w_block_bytes + 2 * out_w * 4  # weights + bias (pipeline keeps 2 buffers)
    rb = max(16, (int(vmem_budget_bytes) - resident) // per_row)

    if block_rows is not None:
        rb = int(block_rows)
    else:
        # Enough steps for the double-buffer pipeline (and both v7x TCs) to overlap,
        # but never shrink tiles below ~512 rows (already ~85% of HBM roofline).
        rb = min(rb, max(512, -(-Rp // int(target_grid_steps))))
        if rb < Rp:
            rb = max(16, (rb // 16) * 16)        # bf16 packs 16 sublanes per vreg
            steps = -(-Rp // rb)
            if steps > 2 and steps % 2 == 1:     # prefer an even step count for v7x megacore
                rb_even = max(16, ((-(-Rp // (steps + 1)) + 15) // 16) * 16)
                if rb_even <= rb:
                    rb = rb_even
    rb = min(rb, Rp)                             # full extent is always legal
    grid = (pl.cdiv(Rp, rb),)

    cost = pl.CostEstimate(
        flops=2 * B * N * (P * P) * hidden,
        transcendentals=0,
        bytes_accessed=(Rp * in_w * x.dtype.itemsize
                        + w_block_bytes + out_w * 4
                        + Rp * out_w * out_itemsize),
    )

    kernel = functools.partial(_patch_embed_kernel, compute_dtype=compute_dtype)
    out2 = pl.pallas_call(
        kernel,
        out_shape=jax.ShapeDtypeStruct((Rp, out_w), out_dtype),
        grid_spec=pltpu.PrefetchScalarGridSpec(
            num_scalar_prefetch=0,
            grid=grid,
            in_specs=[
                pl.BlockSpec((rb, in_w), lambda i: (i, 0)),      # packed patch-row strip
                pl.BlockSpec((in_w, out_w), lambda i: (0, 0)),   # block weight (resident)
                pl.BlockSpec((1, out_w), lambda i: (0, 0)),      # tiled bias (resident)
            ],
            out_specs=pl.BlockSpec((rb, out_w), lambda i: (i, 0)),
        ),
        compiler_params=pltpu.CompilerParams(
            dimension_semantics=("parallel",),
            vmem_limit_bytes=vmem_limit_bytes,
        ),
        cost_estimate=cost,
    )(x2, w_block, b_block)

    # [Rp, rpack*nw*hidden] -> [B, N, hidden]: pure contiguous reshapes, same ordering as
    # conv.flatten(2).transpose(1, 2).
    return out2.reshape(B, N, hidden)


if __name__ == "__main__":
    def _ref(x, weight, bias, P):
        B, _, H, W = x.shape
        hidden = weight.shape[0]
        nh, nw = H // P, W // P
        patches = x.reshape(B, nh, P, nw, P).transpose(0, 1, 3, 2, 4).reshape(B, nh * nw, P * P)
        return jnp.einsum("bnk,hk->bnh", patches, weight.reshape(hidden, P * P)) + bias

    key = jax.random.PRNGKey(0)
    kx, kw_, kb, kx2 = jax.random.split(key, 4)

    # --- test 1: module's toy config (B=2, H=W=16, P=4, hidden=32) ---
    B, H, W, P, hidden = 2, 16, 16, 4, 32
    x = jax.random.normal(kx, (B, 1, H, W), dtype=jnp.float32)
    weight = jax.random.normal(kw_, (hidden, 1, P, P), dtype=jnp.float32) * 0.02
    bias = jax.random.normal(kb, (hidden,), dtype=jnp.float32) * 0.02

    fn = jax.jit(functools.partial(patch_to_vec, patch_size=P))
    out = jax.block_until_ready(fn(x, weight, bias))
    nh, nw = H // P, W // P
    assert out.shape == (B, nh * nw, hidden) and out.dtype == jnp.bfloat16
    ref = _ref(x, weight, bias, P)
    err = float(jnp.max(jnp.abs(out.astype(jnp.float32) - ref)))
    assert jnp.allclose(out.astype(jnp.float32), ref, atol=2e-2, rtol=2e-2), err

    # --- test 2: non-divisible grid (Rp=24, block_rows=16 -> partial last block) ---
    B2, H2, W2 = 3, 32, 32
    xb = jax.random.normal(kx2, (B2, 1, H2, W2), dtype=jnp.float32)
    fn2 = jax.jit(functools.partial(patch_to_vec, patch_size=P, block_rows=16))
    out2 = jax.block_until_ready(fn2(xb, weight, bias))
    nh2, nw2 = H2 // P, W2 // P
    assert out2.shape == (B2, nh2 * nw2, hidden)
    ref2 = _ref(xb, weight, bias, P)
    err2 = float(jnp.max(jnp.abs(out2.astype(jnp.float32) - ref2)))
    assert jnp.allclose(out2.astype(jnp.float32), ref2, atol=2e-2, rtol=2e-2), err2

    print("KERNEL_OK")
</pallas_src>

<mosaic_0001>
module attributes {stable_mosaic.version = 11 : i64} {
  func.func @_patch_embed_kernel(%arg0: i32, %arg1: memref<4x128xf32, #tpu.memory_space<vmem>>, %arg2: memref<128x256xbf16, #tpu.memory_space<vmem>>, %arg3: memref<1x256xf32, #tpu.memory_space<vmem>>, %arg4: memref<4x256xbf16, #tpu.memory_space<vmem>>) attributes {dimension_semantics = [#tpu.dimension_semantics<parallel>], iteration_bounds = array<i64: 1>, scalar_prefetch = 0 : i64, scratch_operands = 0 : i64, tpu.core_type = #tpu.core_type<tc>, window_params = [{transform_indices = @transform_0, window_bounds = array<i64: 4, 128>}, {pipeline_mode = #tpu.pipeline_mode<synchronous>, transform_indices = @transform_1, window_bounds = array<i64: 128, 256>}, {pipeline_mode = #tpu.pipeline_mode<synchronous>, transform_indices = @transform_2, window_bounds = array<i64: 1, 256>}, {transform_indices = @transform_3, window_bounds = array<i64: 4, 256>}]} {
    %c0 = arith.constant 0 : index
    %c0_0 = arith.constant 0 : index
    %0 = vector.load %arg1[%c0, %c0_0] : memref<4x128xf32, #tpu.memory_space<vmem>>, vector<4x128xf32>
    %1 = arith.truncf %0 : vector<4x128xf32> to vector<4x128xbf16>
    %c0_1 = arith.constant 0 : index
    %c0_2 = arith.constant 0 : index
    %2 = vector.load %arg2[%c0_1, %c0_2] : memref<128x256xbf16, #tpu.memory_space<vmem>>, vector<128x256xbf16>
    %cst = arith.constant dense<0.000000e+00> : vector<4x256xf32>
    %3 = tpu.matmul %1, %2, %cst {dimension_numbers = #tpu.dot_dimension_numbers<[1], [0], [0], [1], [0, 0, 1, 1], [], []>} : vector<4x128xbf16>, vector<128x256xbf16>, vector<4x256xf32> -> vector<4x256xf32>
    %c0_3 = arith.constant 0 : index
    %c0_4 = arith.constant 0 : index
    %4 = vector.load %arg3[%c0_3, %c0_4] : memref<1x256xf32, #tpu.memory_space<vmem>>, vector<1x256xf32>
    %5 = vector.broadcast %4 : vector<1x256xf32> to vector<4x256xf32>
    %6 = arith.addf %3, %5 : vector<4x256xf32>
    %7 = arith.truncf %6 : vector<4x256xf32> to vector<4x256xbf16>
    %c0_5 = arith.constant 0 : index
    %c0_6 = arith.constant 0 : index
    %8 = vector.load %arg4[%c0_5, %c0_6] : memref<4x256xbf16, #tpu.memory_space<vmem>>, vector<4x256xbf16>
    tpu.vector_store %arg4[%c0_5, %c0_6], %7 {strides = array<i32>} : memref<4x256xbf16, #tpu.memory_space<vmem>>, vector<4x256xbf16>,
    return
  }
  func.func @transform_0(%arg0: i32) -> (i32, i32) {
    %c0_i32 = arith.constant 0 : i32
    %c0_i32_0 = arith.constant 0 : i32
    return %arg0, %c0_i32 : i32, i32
  }
  func.func @transform_1(%arg0: i32) -> (i32, i32) {
    %c0_i32 = arith.constant 0 : i32
    %c0_i32_0 = arith.constant 0 : i32
    %c0_i32_1 = arith.constant 0 : i32
    return %c0_i32, %c0_i32_0 : i32, i32
  }
  func.func @transform_2(%arg0: i32) -> (i32, i32) {
    %c0_i32 = arith.constant 0 : i32
    %c0_i32_0 = arith.constant 0 : i32
    %c0_i32_1 = arith.constant 0 : i32
    return %c0_i32, %c0_i32_0 : i32, i32
  }
  func.func @transform_3(%arg0: i32) -> (i32, i32) {
    %c0_i32 = arith.constant 0 : i32
    %c0_i32_0 = arith.constant 0 : i32
    return %arg0, %c0_i32 : i32, i32
  }
}

</mosaic_0001>

<llo_original>
// kernel: tile.8
$region0: #{tile.8}
  #allocation0 [shape = 's32[1]{0}', space=sflag, size = 0x4, scoped, tag = 'scoped memory for tile.8']
  %s0 = inlined_call_operand.vmem [shape: f32[32], index: 0, kind: input, shape index: {}]
  %s1 = inlined_call_operand.vmem [shape: f32[8,32], index: 1, kind: output, shape index: {}]
  // Predicated region
  $region2: #{tile.8} parent=0 // pred_check
    _
  $region3: #{tile.8} parent=0 // pred_check_branch
    %3 = sbr.rel (0) target = $region5
  $region4: #{tile.8} parent=0 // pred_region
    _
  $region5: #{tile.8} parent=0 // pred_fallthru
    _
  %v4 = vld [vmem:[%s0] ss:$0 sm:$0xff]
  %5 = vst [vmem:[%s1] sm:$0xff] %v4

// kernel: tile.9
$region0: #{tile.9}
  %s0 = inlined_call_operand.vmem [shape: f32[8,32], index: 0, kind: input, shape index: {}]
  %s1 = inlined_call_operand.vmem [shape: f32[1,256], index: 1, kind: output, shape index: {}]
  $region1: #{tile.9} parent=0
    #allocation0 [shape = 'u8[8192]{0}', space=vmem, size = 0x2000, scoped, tag = 'scoped mem for output reshape']
    %s2 = smov 3
    %v3 = vld [vmem:[%s0] ss:$4 sm:%s2]
    %vm4 = vcmask 261120
    %5 = vst.msk [vmem:[#allocation0] ss:$8 sm:$0x3] %vm4, %v3
    %s6 = scalar_lea.vmem %s0, 3
    %s7 = smov 3
    %v8 = vld [vmem:[%s6] ss:$4 sm:%s7]
    %9 = vrot.lane.b32.xlu0 %v8, 96
    %v10 = vpop.permute.xlu0 %9
    %vm11 = vcmask 1048320
    %12 = vst.msk [vmem:[#allocation0] ss:$8 sm:$0x3] %vm11, %v10
    %s13 = scalar_lea.vmem %s0, 2
    %s14 = smov 3
    %v15 = vld [vmem:[%s13] ss:$4 sm:%s14]
    %16 = vrot.lane.b32.xlu0 %v15, 64
    %v17 = vpop.permute.xlu0 %16
    %vm18 = vcmask 785920
    %19 = vst.msk [vmem:[#allocation0] ss:$8 sm:$0x3] %vm18, %v17
    %s20 = scalar_lea.vmem %s0, 1
    %s21 = smov 3
    %v22 = vld [vmem:[%s20] ss:$4 sm:%s21]
    %23 = vrot.lane.b32.xlu0 %v22, 32
    %v24 = vpop.permute.xlu0 %23
    %vm25 = vcmask 523520
    %26 = vst.msk [vmem:[#allocation0] ss:$8 sm:$0x3] %vm25, %v24
    %s28 = sshll.u32 1, 1
    %s29 = ssub.s32 %s28, 1
    %v31 = vld [vmem:[#allocation0] sm:%s29]
    %s32 = sshll.u32 1, 1
    %s33 = ssub.s32 %s32, 1
    %34 = vst [vmem:[%s1] sm:%s33] %v31
    %s35 = scalar_lea.vmem [#allocation0], 8
    %v36 = vld [vmem:[%s35] sm:%s29]
    %s37 = sshll.u32 1, 1
    %s38 = ssub.s32 %s37, 1
    %s39 = scalar_lea.vmem %s1, 1
    %40 = vst [vmem:[%s39] sm:%s38] %v36

// kernel: patch_to_vec.1
$region0: #{patch_to_vec.1}
  #allocation0 [shape = 'u32[]', space=smem, size = 0x4, offset = 0x4, fixed_abs, tag = 'smem constant byte address 0x4 - core index']
  #allocation1 [shape = 'u32[144,128]{1,0:T(1,128)}', space=vmem, size = 0x12000, scoped, tag = 'internal scratch']
  %s0 = inlined_call_operand.vmem [shape: f32[4,128], index: 0, kind: input, shape index: {}]
  %s1 = inlined_call_operand.vmem [shape: bf16[128,256], index: 1, kind: input, shape index: {}]
  %s2 = inlined_call_operand.vmem [shape: f32[1,256], index: 2, kind: input, shape index: {}]
  %s3 = inlined_call_operand.vmem [shape: bf16[4,256], index: 3, kind: output, shape index: {}]
  %s4 = sld [smem:[#allocation0]]
  $region22: #{patch_to_vec.1} parent=0
    _
  %s6 = ssub.s32 1, %s4
  %s7 = scalar_select 0, %s6, %s4
  // Predicated region
  $region2: #{patch_to_vec.1} parent=0 // pred_check
    _
  $region3: #{patch_to_vec.1} parent=0 // pred_check_branch
    %9 = sbr.rel (0) target = $region5
  $region4: #{patch_to_vec.1} parent=0 // pred_region
    _
  $region5: #{patch_to_vec.1} parent=0 // pred_fallthru
    _
  // Predicated region
  $region6: #{patch_to_vec.1} parent=0 // pred_check
    _
  $region7: #{patch_to_vec.1} parent=0 // pred_check_branch
    %11 = sbr.rel (0) target = $region9
  $region8: #{patch_to_vec.1} parent=0 // pred_region
    _
  $region9: #{patch_to_vec.1} parent=0 // pred_fallthru
    _
  // Predicated region
  $region10: #{patch_to_vec.1} parent=0 // pred_check
    _
  $region11: #{patch_to_vec.1} parent=0 // pred_check_branch
    %13 = sbr.rel (0) target = $region13
  $region12: #{patch_to_vec.1} parent=0 // pred_region
    _
  $region13: #{patch_to_vec.1} parent=0 // pred_fallthru
    _
  %v15 = vld [vmem:[%s0] sm:$0xf]
  %v16 = vpack.c.bf16 %v15, %v15
  %v17 = vld [vmem:[%s1] sm:$0xff]
  %v18 = vld [vmem:[%s1 + $0x8] sm:$0xff]
  %v19 = vld [vmem:[%s1 + $0x10] sm:$0xff]
  %v20 = vld [vmem:[%s1 + $0x18] sm:$0xff]
  %v21 = vld [vmem:[%s1 + $0x20] sm:$0xff]
  %v22 = vld [vmem:[%s1 + $0x28] sm:$0xff]
  %v23 = vld [vmem:[%s1 + $0x30] sm:$0xff]
  %v24 = vld [vmem:[%s1 + $0x38] sm:$0xff]
  %v25 = vld [vmem:[%s1 + $0x40] sm:$0xff]
  %v26 = vld [vmem:[%s1 + $0x48] sm:$0xff]
  %v27 = vld [vmem:[%s1 + $0x50] sm:$0xff]
  %v28 = vld [vmem:[%s1 + $0x58] sm:$0xff]
  %v29 = vld [vmem:[%s1 + $0x60] sm:$0xff]
  %v30 = vld [vmem:[%s1 + $0x68] sm:$0xff]
  %v31 = vld [vmem:[%s1 + $0x70] sm:$0xff]
  %v32 = vld [vmem:[%s1 + $0x78] sm:$0xff]
  %v33 = vld [vmem:[%s2] sm:$0x3]
  %v35 = vlaneseq
  %v36 = vshrl.u32 %v35, 7
  %v37 = vsub.s32 0, %v36
  %v38 = vrot.slane %v33, %v37
  %v39 = vlaneseq
  %v40 = vshrl.u32 %v39, 7
  %v41 = vsub.s32 1, %v40
  %v42 = vrot.slane %v33, %v41
  %v61 = vunpack.c.l.b16 %v17
  %v62 = vunpack.c.h.b16 %v17
  %v63 = vunpack.c.l.b16 %v18
  %v64 = vunpack.c.h.b16 %v18
  %v65 = vunpack.c.l.b16 %v19
  %v66 = vunpack.c.h.b16 %v19
  %v67 = vunpack.c.l.b16 %v20
  %v68 = vunpack.c.h.b16 %v20
  %v69 = vunpack.c.l.b16 %v21
  %v70 = vunpack.c.h.b16 %v21
  %v71 = vunpack.c.l.b16 %v22
  %v72 = vunpack.c.h.b16 %v22
  %v73 = vunpack.c.l.b16 %v23
  %v74 = vunpack.c.h.b16 %v23
  %v75 = vunpack.c.l.b16 %v24
  %v76 = vunpack.c.h.b16 %v24
  %v77 = vunpack.c.l.b16 %v25
  %v78 = vunpack.c.h.b16 %v25
  %v79 = vunpack.c.l.b16 %v26
  %v80 = vunpack.c.h.b16 %v26
  %v81 = vunpack.c.l.b16 %v27
  %v82 = vunpack.c.h.b16 %v27
  %v83 = vunpack.c.l.b16 %v28
  %v84 = vunpack.c.h.b16 %v28
  %v85 = vunpack.c.l.b16 %v29
  %v86 = vunpack.c.h.b16 %v29
  %v87 = vunpack.c.l.b16 %v30
  %v88 = vunpack.c.h.b16 %v30
  %v89 = vunpack.c.l.b16 %v31
  %v90 = vunpack.c.h.b16 %v31
  %v91 = vunpack.c.l.b16 %v32
  %v92 = vunpack.c.h.b16 %v32
  %v93 = vpack.c.b16 %v63, %v61
  %v94 = vpack.c.b16 %v64, %v62
  %v95 = vpack.c.b16 %v67, %v65
  %v96 = vpack.c.b16 %v68, %v66
  %v97 = vpack.c.b16 %v71, %v69
  %v98 = vpack.c.b16 %v72, %v70
  %v99 = vpack.c.b16 %v75, %v73
  %v100 = vpack.c.b16 %v76, %v74
  %v101 = vpack.c.b16 %v79, %v77
  %v102 = vpack.c.b16 %v80, %v78
  %v103 = vpack.c.b16 %v83, %v81
  %v104 = vpack.c.b16 %v84, %v82
  %v105 = vpack.c.b16 %v87, %v85
  %v106 = vpack.c.b16 %v88, %v86
  %v107 = vpack.c.b16 %v91, %v89
  %v108 = vpack.c.b16 %v92, %v90
  %125 = vmatprep.subr.bf16.mxu0 %v108
  %126 = vmatpush1.bf16.msra.mxu0 %v107
  %127 = vmatprep.subr.bf16.mxu0 %v106
  %128 = vmatpush1.bf16.msra.mxu0 %v105
  %129 = vmatprep.subr.bf16.mxu0 %v104
  %130 = vmatpush1.bf16.msra.mxu0 %v103
  %131 = vmatprep.subr.bf16.mxu0 %v102
  %132 = vmatpush1.bf16.msra.mxu0 %v101
  %133 = vmatprep.subr.bf16.mxu0 %v100
  %134 = vmatpush1.bf16.msra.mxu0 %v99
  %135 = vmatprep.subr.bf16.mxu0 %v98
  %136 = vmatpush1.bf16.msra.mxu0 %v97
  %137 = vmatprep.subr.bf16.mxu0 %v96
  %138 = vmatpush1.bf16.msra.mxu0 %v95
  %139 = vmatprep.subr.bf16.mxu0 %v94
  %140 = vmatpush1.bf16.msra.mxu0 %v93
  %141 = vmatprep.subr.bf16.mxu0 0
  %142 = vmatpush2.bf16.msra.mxu0 0
  %143 = vmatprep.subr.bf16.mxu0 0
  %144 = vmatpush2.bf16.msra.mxu0 0
  %145 = vmatprep.subr.bf16.mxu0 0
  %146 = vmatpush2.bf16.msra.mxu0 0
  %147 = vmatprep.subr.bf16.mxu0 0
  %148 = vmatpush2.bf16.msra.mxu0 0
  %149 = vmatprep.subr.bf16.mxu0 0
  %150 = vmatpush2.bf16.msra.mxu0 0
  %151 = vmatprep.subr.bf16.mxu0 0
  %152 = vmatpush2.bf16.msra.mxu0 0
  %153 = vmatprep.subr.bf16.mxu0 0
  %154 = vmatpush2.bf16.msra.mxu0 0
  %155 = vmatprep.subr.bf16.mxu0 0
  %156 = vmatpush2.bf16.msra.mxu0 0
  %157 = vmatprep.mubr.bf16.mxu0 0
  %158 = vmatmul.mubr.bf16.gmra.mxu0 %v16
  %v159 = vpop.f32.mrf.mxu0
  %v160 = vadd.f32 %v38, %v159
  %v161 = vpop.f32.mrf.mxu0
  %v162 = vadd.f32 %v42, %v161
  %v163 = vpop.f32.mrf.mxu0
  %v164 = vpop.f32.mrf.mxu0
  %165 = vdwg.mxu0
  %v166 = vpack.c.bf16 %v160, %v160
  %v167 = vpack.c.bf16 %v162, %v162
  %v170 = vcombine.low %v166, %v167
  %v172 = vunpack.c.l.s4 1983009808
  %v173 = vunpack.c.0.s8 %v172
  %v174 = vlaneseq
  %v175 = vshrl.u32 %v174, 7
  %v176 = vsub.s32 %v173, %v175
  %v177 = vrot.slane %v170, %v176
  %179 = vst [vmem:[%s3] sm:$0xf] %v177
  // Predicated region
  $region14: #{patch_to_vec.1} parent=0 // pred_check
    _
  $region15: #{patch_to_vec.1} parent=0 // pred_check_branch
    %181 = sbr.rel (0) target = $region17
  $region16: #{patch_to_vec.1} parent=0 // pred_region
    _
  $region17: #{patch_to_vec.1} parent=0 // pred_fallthru
    _
  // Predicated region
  $region18: #{patch_to_vec.1} parent=0 // pred_check
    _
  $region19: #{patch_to_vec.1} parent=0 // pred_check_branch
    %183 = sbr.rel (0) target = $region21
  $region20: #{patch_to_vec.1} parent=0 // pred_region
    _
  $region21: #{patch_to_vec.1} parent=0 // pred_fallthru
    _

</llo_original>
